<compile_context>
chip_gen: v5e
topology: v5e:2x2
jax: 0.10.0
libtpu: 0.0.40
codegen_flags: <defaults>
</compile_context>

<pallas_src>
import jax
import jax.numpy as jnp
from jax.experimental import pallas as pl
from jax.experimental.pallas import tpu as pltpu


def _make_copy_kernel(row_bounds):
    """Build a kernel copying a [rows, cols] array HBM->HBM in len(row_bounds) DMAs.

    row_bounds: list of (start, size) Python ints covering [0, rows) contiguously.
    All DMAs are issued back-to-back (multiple DMA channels), then waited on.
    """

    def kernel(x_hbm, o_hbm, sem):
        copies = []
        for i, (start, size) in enumerate(row_bounds):
            cp = pltpu.make_async_copy(
                x_hbm.at[pl.ds(start, size), :],
                o_hbm.at[pl.ds(start, size), :],
                sem.at[i],
            )
            cp.start()
            copies.append(cp)
        for cp in copies:
            cp.wait()

    return kernel


def _chunk_rows(rows, max_chunks=4):
    """Split [0, rows) into up to max_chunks contiguous (start, size) chunks."""
    n_chunks = max(1, min(max_chunks, rows))
    base, rem = divmod(rows, n_chunks)
    bounds = []
    start = 0
    for i in range(n_chunks):
        size = base + (1 if i < rem else 0)
        bounds.append((start, size))
        start += size
    return bounds


def identity_decoder(embedding: jnp.ndarray) -> jnp.ndarray:
    """Pallas equivalent of IdentityDecoder.forward.

    embedding: [M, N, V] — returned unchanged (bit-exact copy via HBM->HBM DMA).
    """
    assert embedding.ndim == 3, "embedding should be [M][N][V]"
    M, N, V = embedding.shape

    # Metadata-only reshape of a contiguous row-major array; gives a simple
    # 2-D row range to chunk along regardless of how M/N/V are distributed.
    rows, cols = M * N, V
    x2d = embedding.reshape(rows, cols)

    row_bounds = _chunk_rows(rows, max_chunks=4)
    kernel = _make_copy_kernel(row_bounds)

    itemsize = jnp.dtype(embedding.dtype).itemsize
    total_bytes = rows * cols * itemsize

    out2d = pl.pallas_call(
        kernel,
        out_shape=jax.ShapeDtypeStruct((rows, cols), embedding.dtype),
        in_specs=[pl.BlockSpec(memory_space=pl.ANY)],
        out_specs=pl.BlockSpec(memory_space=pl.ANY),
        scratch_shapes=[pltpu.SemaphoreType.DMA((len(row_bounds),))],
        cost_estimate=pl.CostEstimate(
            flops=0, transcendentals=0, bytes_accessed=2 * total_bytes
        ),
    )(x2d)

    return out2d.reshape(M, N, V)


if __name__ == "__main__":
    # IdentityDecoder has no parameters (empty __init__), so nothing to init.
    key = jax.random.PRNGKey(0)
    M, N, V = 2, 8, 32  # small [M][N][V] consistent with the module's contract
    embedding = jax.random.normal(key, (M, N, V), dtype=jnp.float32)

    out = identity_decoder(embedding)
    out = jax.block_until_ready(out)

    assert out.shape == (M, N, V)
    assert out.dtype == embedding.dtype
    assert bool(jnp.array_equal(out, embedding))

    print("KERNEL_OK")
</pallas_src>

<mosaic_0001>
module attributes {stable_mosaic.version = 11 : i64} {
  func.func @kernel(%arg0: memref<16x32xf32, #tpu.memory_space<any>>, %arg1: memref<16x32xf32, #tpu.memory_space<any>>, %arg2: memref<4x!tpu.dma_semaphore, #tpu.memory_space<semaphore_mem>>) attributes {dimension_semantics = [], scalar_prefetch = 0 : i64, scratch_operands = 1 : i64, tpu.core_type = #tpu.core_type<tc>} {
    %c0_i32 = arith.constant 0 : i32
    %c0_i32_0 = arith.constant 0 : i32
    %c0_i32_1 = arith.constant 0 : i32
    %0 = tpu.memref_slice %arg0[%c0_i32_0, %c0_i32_1] : memref<16x32xf32, #tpu.memory_space<any>> -> memref<4x32xf32, #tpu.memory_space<any>>
    %c0_i32_2 = arith.constant 0 : i32
    %c0_i32_3 = arith.constant 0 : i32
    %1 = tpu.memref_slice %arg1[%c0_i32_2, %c0_i32_3] : memref<16x32xf32, #tpu.memory_space<any>> -> memref<4x32xf32, #tpu.memory_space<any>>
    %2 = tpu.memref_slice %arg2[%c0_i32] : memref<4x!tpu.dma_semaphore, #tpu.memory_space<semaphore_mem>> -> memref<1x!tpu.dma_semaphore, #tpu.memory_space<semaphore_mem>>
    %3 = tpu.memref_squeeze %2 : memref<1x!tpu.dma_semaphore, #tpu.memory_space<semaphore_mem>> -> memref<!tpu.dma_semaphore, #tpu.memory_space<semaphore_mem>>
    tpu.enqueue_dma source(%0 : memref<4x32xf32, #tpu.memory_space<any>>) target(%1 : memref<4x32xf32, #tpu.memory_space<any>>) target_semaphore(%3 : memref<!tpu.dma_semaphore, #tpu.memory_space<semaphore_mem>>)
    %c1_i32 = arith.constant 1 : i32
    %c4_i32 = arith.constant 4 : i32
    %c0_i32_4 = arith.constant 0 : i32
    %4 = tpu.memref_slice %arg0[%c4_i32, %c0_i32_4] : memref<16x32xf32, #tpu.memory_space<any>> -> memref<4x32xf32, #tpu.memory_space<any>>
    %c4_i32_5 = arith.constant 4 : i32
    %c0_i32_6 = arith.constant 0 : i32
    %5 = tpu.memref_slice %arg1[%c4_i32_5, %c0_i32_6] : memref<16x32xf32, #tpu.memory_space<any>> -> memref<4x32xf32, #tpu.memory_space<any>>
    %6 = tpu.memref_slice %arg2[%c1_i32] : memref<4x!tpu.dma_semaphore, #tpu.memory_space<semaphore_mem>> -> memref<1x!tpu.dma_semaphore, #tpu.memory_space<semaphore_mem>>
    %7 = tpu.memref_squeeze %6 : memref<1x!tpu.dma_semaphore, #tpu.memory_space<semaphore_mem>> -> memref<!tpu.dma_semaphore, #tpu.memory_space<semaphore_mem>>
    tpu.enqueue_dma source(%4 : memref<4x32xf32, #tpu.memory_space<any>>) target(%5 : memref<4x32xf32, #tpu.memory_space<any>>) target_semaphore(%7 : memref<!tpu.dma_semaphore, #tpu.memory_space<semaphore_mem>>)
    %c2_i32 = arith.constant 2 : i32
    %c8_i32 = arith.constant 8 : i32
    %c0_i32_7 = arith.constant 0 : i32
    %8 = tpu.memref_slice %arg0[%c8_i32, %c0_i32_7] : memref<16x32xf32, #tpu.memory_space<any>> -> memref<4x32xf32, #tpu.memory_space<any>>
    %c8_i32_8 = arith.constant 8 : i32
    %c0_i32_9 = arith.constant 0 : i32
    %9 = tpu.memref_slice %arg1[%c8_i32_8, %c0_i32_9] : memref<16x32xf32, #tpu.memory_space<any>> -> memref<4x32xf32, #tpu.memory_space<any>>
    %10 = tpu.memref_slice %arg2[%c2_i32] : memref<4x!tpu.dma_semaphore, #tpu.memory_space<semaphore_mem>> -> memref<1x!tpu.dma_semaphore, #tpu.memory_space<semaphore_mem>>
    %11 = tpu.memref_squeeze %10 : memref<1x!tpu.dma_semaphore, #tpu.memory_space<semaphore_mem>> -> memref<!tpu.dma_semaphore, #tpu.memory_space<semaphore_mem>>
    tpu.enqueue_dma source(%8 : memref<4x32xf32, #tpu.memory_space<any>>) target(%9 : memref<4x32xf32, #tpu.memory_space<any>>) target_semaphore(%11 : memref<!tpu.dma_semaphore, #tpu.memory_space<semaphore_mem>>)
    %c3_i32 = arith.constant 3 : i32
    %c12_i32 = arith.constant 12 : i32
    %c0_i32_10 = arith.constant 0 : i32
    %12 = tpu.memref_slice %arg0[%c12_i32, %c0_i32_10] : memref<16x32xf32, #tpu.memory_space<any>> -> memref<4x32xf32, #tpu.memory_space<any>>
    %c12_i32_11 = arith.constant 12 : i32
    %c0_i32_12 = arith.constant 0 : i32
    %13 = tpu.memref_slice %arg1[%c12_i32_11, %c0_i32_12] : memref<16x32xf32, #tpu.memory_space<any>> -> memref<4x32xf32, #tpu.memory_space<any>>
    %14 = tpu.memref_slice %arg2[%c3_i32] : memref<4x!tpu.dma_semaphore, #tpu.memory_space<semaphore_mem>> -> memref<1x!tpu.dma_semaphore, #tpu.memory_space<semaphore_mem>>
    %15 = tpu.memref_squeeze %14 : memref<1x!tpu.dma_semaphore, #tpu.memory_space<semaphore_mem>> -> memref<!tpu.dma_semaphore, #tpu.memory_space<semaphore_mem>>
    tpu.enqueue_dma source(%12 : memref<4x32xf32, #tpu.memory_space<any>>) target(%13 : memref<4x32xf32, #tpu.memory_space<any>>) target_semaphore(%15 : memref<!tpu.dma_semaphore, #tpu.memory_space<semaphore_mem>>)
    %c0_i32_13 = arith.constant 0 : i32
    %c0_i32_14 = arith.constant 0 : i32
    %c0_i32_15 = arith.constant 0 : i32
    %16 = tpu.memref_slice %arg0[%c0_i32_14, %c0_i32_15] : memref<16x32xf32, #tpu.memory_space<any>> -> memref<4x32xf32, #tpu.memory_space<any>>
    %c0_i32_16 = arith.constant 0 : i32
    %c0_i32_17 = arith.constant 0 : i32
    %17 = tpu.memref_slice %arg1[%c0_i32_16, %c0_i32_17] : memref<16x32xf32, #tpu.memory_space<any>> -> memref<4x32xf32, #tpu.memory_space<any>>
    %18 = tpu.memref_slice %arg2[%c0_i32_13] : memref<4x!tpu.dma_semaphore, #tpu.memory_space<semaphore_mem>> -> memref<1x!tpu.dma_semaphore, #tpu.memory_space<semaphore_mem>>
    %19 = tpu.memref_squeeze %18 : memref<1x!tpu.dma_semaphore, #tpu.memory_space<semaphore_mem>> -> memref<!tpu.dma_semaphore, #tpu.memory_space<semaphore_mem>>
    tpu.wait_dma2 semaphore(%19 : memref<!tpu.dma_semaphore, #tpu.memory_space<semaphore_mem>>) src(%16 : memref<4x32xf32, #tpu.memory_space<any>>) dst(%17 : memref<4x32xf32, #tpu.memory_space<any>>)
    %c1_i32_18 = arith.constant 1 : i32
    %c4_i32_19 = arith.constant 4 : i32
    %c0_i32_20 = arith.constant 0 : i32
    %20 = tpu.memref_slice %arg0[%c4_i32_19, %c0_i32_20] : memref<16x32xf32, #tpu.memory_space<any>> -> memref<4x32xf32, #tpu.memory_space<any>>
    %c4_i32_21 = arith.constant 4 : i32
    %c0_i32_22 = arith.constant 0 : i32
    %21 = tpu.memref_slice %arg1[%c4_i32_21, %c0_i32_22] : memref<16x32xf32, #tpu.memory_space<any>> -> memref<4x32xf32, #tpu.memory_space<any>>
    %22 = tpu.memref_slice %arg2[%c1_i32_18] : memref<4x!tpu.dma_semaphore, #tpu.memory_space<semaphore_mem>> -> memref<1x!tpu.dma_semaphore, #tpu.memory_space<semaphore_mem>>
    %23 = tpu.memref_squeeze %22 : memref<1x!tpu.dma_semaphore, #tpu.memory_space<semaphore_mem>> -> memref<!tpu.dma_semaphore, #tpu.memory_space<semaphore_mem>>
    tpu.wait_dma2 semaphore(%23 : memref<!tpu.dma_semaphore, #tpu.memory_space<semaphore_mem>>) src(%20 : memref<4x32xf32, #tpu.memory_space<any>>) dst(%21 : memref<4x32xf32, #tpu.memory_space<any>>)
    %c2_i32_23 = arith.constant 2 : i32
    %c8_i32_24 = arith.constant 8 : i32
    %c0_i32_25 = arith.constant 0 : i32
    %24 = tpu.memref_slice %arg0[%c8_i32_24, %c0_i32_25] : memref<16x32xf32, #tpu.memory_space<any>> -> memref<4x32xf32, #tpu.memory_space<any>>
    %c8_i32_26 = arith.constant 8 : i32
    %c0_i32_27 = arith.constant 0 : i32
    %25 = tpu.memref_slice %arg1[%c8_i32_26, %c0_i32_27] : memref<16x32xf32, #tpu.memory_space<any>> -> memref<4x32xf32, #tpu.memory_space<any>>
    %26 = tpu.memref_slice %arg2[%c2_i32_23] : memref<4x!tpu.dma_semaphore, #tpu.memory_space<semaphore_mem>> -> memref<1x!tpu.dma_semaphore, #tpu.memory_space<semaphore_mem>>
    %27 = tpu.memref_squeeze %26 : memref<1x!tpu.dma_semaphore, #tpu.memory_space<semaphore_mem>> -> memref<!tpu.dma_semaphore, #tpu.memory_space<semaphore_mem>>
    tpu.wait_dma2 semaphore(%27 : memref<!tpu.dma_semaphore, #tpu.memory_space<semaphore_mem>>) src(%24 : memref<4x32xf32, #tpu.memory_space<any>>) dst(%25 : memref<4x32xf32, #tpu.memory_space<any>>)
    %c3_i32_28 = arith.constant 3 : i32
    %c12_i32_29 = arith.constant 12 : i32
    %c0_i32_30 = arith.constant 0 : i32
    %28 = tpu.memref_slice %arg0[%c12_i32_29, %c0_i32_30] : memref<16x32xf32, #tpu.memory_space<any>> -> memref<4x32xf32, #tpu.memory_space<any>>
    %c12_i32_31 = arith.constant 12 : i32
    %c0_i32_32 = arith.constant 0 : i32
    %29 = tpu.memref_slice %arg1[%c12_i32_31, %c0_i32_32] : memref<16x32xf32, #tpu.memory_space<any>> -> memref<4x32xf32, #tpu.memory_space<any>>
    %30 = tpu.memref_slice %arg2[%c3_i32_28] : memref<4x!tpu.dma_semaphore, #tpu.memory_space<semaphore_mem>> -> memref<1x!tpu.dma_semaphore, #tpu.memory_space<semaphore_mem>>
    %31 = tpu.memref_squeeze %30 : memref<1x!tpu.dma_semaphore, #tpu.memory_space<semaphore_mem>> -> memref<!tpu.dma_semaphore, #tpu.memory_space<semaphore_mem>>
    tpu.wait_dma2 semaphore(%31 : memref<!tpu.dma_semaphore, #tpu.memory_space<semaphore_mem>>) src(%28 : memref<4x32xf32, #tpu.memory_space<any>>) dst(%29 : memref<4x32xf32, #tpu.memory_space<any>>)
    return
  }
}

</mosaic_0001>

<llo_original>
// kernel: tpu_custom_call.1
$region0: #{tpu_custom_call.1}
  #allocation0 [shape = 'u32[]', space=smem, size = 0x4, offset = 0x4, fixed_abs, tag = 'smem constant byte address 0x4 - core index']
  #allocation1 [shape = 'u32[72,128]{1,0:T(1,128)}', space=vmem, size = 0x9000, scoped, tag = 'internal scratch']
  #allocation2 [shape = 's32[4]{0}', space=sflag, size = 0x10, scoped, tag = 'scratch operand']
  #allocation3 [shape = 's32[]', space=sflag, size = 0x4, offset = 0, fixed_abs, tag = 'sflag constant byte address 0x0 - dummy sync flag']
  #allocation4 [shape = 'u32[0]{0}', space=smem, size = 0, offset = 0, fixed_abs, tag = 'smem constant byte address 0x0 - null']
  #allocation5 [shape = 's32[]', space=sflag, size = 0x4, offset = 0, fixed_abs, tag = 'sflag constant byte address 0x0 - dummy sync flag']
  #allocation6 [shape = 'u32[0]{0}', space=smem, size = 0, offset = 0, fixed_abs, tag = 'smem constant byte address 0x0 - null']
  #allocation7 [shape = 's32[]', space=sflag, size = 0x4, offset = 0, fixed_abs, tag = 'sflag constant byte address 0x0 - dummy sync flag']
  #allocation8 [shape = 'u32[0]{0}', space=smem, size = 0, offset = 0, fixed_abs, tag = 'smem constant byte address 0x0 - null']
  #allocation9 [shape = 's32[]', space=sflag, size = 0x4, offset = 0, fixed_abs, tag = 'sflag constant byte address 0x0 - dummy sync flag']
  #allocation10 [shape = 'u32[0]{0}', space=smem, size = 0, offset = 0, fixed_abs, tag = 'smem constant byte address 0x0 - null']
  %s0 = inlined_call_operand.hbm [shape: f32[16,32], index: 0, kind: input, shape index: {}]
  %s1 = inlined_call_operand.hbm [shape: f32[16,32], index: 1, kind: output, shape index: {}]
  %s2 = sld [smem:[#allocation0]]
  $region2: #{tpu_custom_call.1} parent=0
    _
  %s4 = ssub.s32 1, %s2
  %s5 = scalar_select 0, %s4, %s2
  %s7 = sshll.u32 1, 14
  %s8 = sxor.u32 4294967295, %s7
  %s10 = sshll.u32 %s0, 4
  %s11 = int_to_ptr.hbm [resolvable:$true] %s10
  %s12 = sshll.u32 %s1, 4
  %s13 = int_to_ptr.hbm [resolvable:$true] %s12
  %16 = dma.general %s11, 64, %s13, [#allocation2], [#allocation3], [#allocation4], 0, 0
  %s17 = scalar_lea.hbm %s0, 4
  %s18 = scalar_lea.hbm %s1, 4
  %s19 = scalar_lea.sflag [#allocation2], 1
  %s21 = sshll.u32 1, 14
  %s22 = sxor.u32 4294967295, %s21
  %s24 = sshll.u32 %s17, 4
  %s25 = int_to_ptr.hbm [resolvable:$true] %s24
  %s26 = sshll.u32 %s18, 4
  %s27 = int_to_ptr.hbm [resolvable:$true] %s26
  %30 = dma.general %s25, 64, %s27, %s19, [#allocation5], [#allocation6], 0, 0
  %s31 = scalar_lea.hbm %s0, 8
  %s32 = scalar_lea.hbm %s1, 8
  %s33 = scalar_lea.sflag [#allocation2], 2
  %s35 = sshll.u32 1, 14
  %s36 = sxor.u32 4294967295, %s35
  %s38 = sshll.u32 %s31, 4
  %s39 = int_to_ptr.hbm [resolvable:$true] %s38
  %s40 = sshll.u32 %s32, 4
  %s41 = int_to_ptr.hbm [resolvable:$true] %s40
  %44 = dma.general %s39, 64, %s41, %s33, [#allocation7], [#allocation8], 0, 0
  %s45 = scalar_lea.hbm %s0, 12
  %s46 = scalar_lea.hbm %s1, 12
  %s47 = scalar_lea.sflag [#allocation2], 3
  %s49 = sshll.u32 1, 14
  %s50 = sxor.u32 4294967295, %s49
  %s52 = sshll.u32 %s45, 4
  %s53 = int_to_ptr.hbm [resolvable:$true] %s52
  %s54 = sshll.u32 %s46, 4
  %s55 = int_to_ptr.hbm [resolvable:$true] %s54
  %58 = dma.general %s53, 64, %s55, %s47, [#allocation9], [#allocation10], 0, 0
  %s59 = smul.u32 4, 1
  %s60 = sshll.u32 %s59, 4
  %61 = dma.done [#allocation2], %s60
  %s62 = sshll.u32 %s59, 4
  %63 = dma.done %s19, %s62
  %s64 = sshll.u32 %s59, 4
  %65 = dma.done %s33, %s64
  %s66 = sshll.u32 %s59, 4
  %67 = dma.done %s47, %s66
  %68 = vsyncmov [#allocation2]
  %s69 = vpop.sfrf %68
  %p70 = scmp.eq.s32.totalorder %s69, 0
  %p71 = pneg %p70
  %73 = shalt.err (%p71)
  %s74 = scalar_lea.sflag [#allocation2], 1
  %75 = vsyncmov %s74
  %s76 = vpop.sfrf %75
  %p77 = scmp.eq.s32.totalorder %s76, 0
  %p78 = pneg %p77
  %80 = shalt.err (%p78)
  %s81 = scalar_lea.sflag [#allocation2], 2
  %82 = vsyncmov %s81
  %s83 = vpop.sfrf %82
  %p84 = scmp.eq.s32.totalorder %s83, 0
  %p85 = pneg %p84
  %87 = shalt.err (%p85)
  %s88 = scalar_lea.sflag [#allocation2], 3
  %89 = vsyncmov %s88
  %s90 = vpop.sfrf %89
  %p91 = scmp.eq.s32.totalorder %s90, 0
  %p92 = pneg %p91
  %94 = shalt.err (%p92)

</llo_original>
